<compile_context>
chip_gen: v5e
topology: v5e:2x2
jax: 0.10.0
libtpu: 0.0.40
codegen_flags: <defaults>
</compile_context>

<pallas_src>
import functools

import jax
import jax.numpy as jnp
from jax.experimental import pallas as pl
from jax.experimental.pallas import tpu as pltpu

_EPS = 1e-5


# ----------------------------------------------------------------------------
# Kernels
# ----------------------------------------------------------------------------
def _fused_kernel(x_ref, gamma_ref, beta_ref, o_ref, *, count, eps):
    """Single-pass BN: whole tensor resident in VMEM. Exact two-step variance."""
    x = x_ref[...].astype(jnp.float32)                        # (N, C, L)
    s = jnp.sum(jnp.sum(x, axis=2, keepdims=True), axis=0, keepdims=True)
    mean = s * (1.0 / count)                                  # (1, C, 1)
    xc = x - mean
    var = jnp.sum(jnp.sum(xc * xc, axis=2, keepdims=True),
                  axis=0, keepdims=True) * (1.0 / count)
    inv_std = jax.lax.rsqrt(var + eps)
    scale = gamma_ref[...].astype(jnp.float32)[None, :, :] * inv_std
    shift = beta_ref[...].astype(jnp.float32)[None, :, :]
    o_ref[...] = (xc * scale + shift).astype(o_ref.dtype)


def _stats_kernel(x_ref, sum_ref, sumsq_ref):
    """Pass 1: accumulate per-channel sum / sum-of-squares over (N, L)."""

    @pl.when(jnp.logical_and(pl.program_id(1) == 0, pl.program_id(2) == 0))
    def _():
        sum_ref[...] = jnp.zeros_like(sum_ref)
        sumsq_ref[...] = jnp.zeros_like(sumsq_ref)

    x = x_ref[...].astype(jnp.float32)            # (n_tile, c_tile, l_tile)
    s = jnp.sum(x, axis=2, keepdims=True)         # lane reduce -> (n, c, 1)
    sq = jnp.sum(x * x, axis=2, keepdims=True)
    sum_ref[...] += jnp.sum(s, axis=0)            # (c_tile, 1)
    sumsq_ref[...] += jnp.sum(sq, axis=0)


def _apply_kernel(x_ref, sums_ref, sumsq_ref, gamma_ref, beta_ref, o_ref,
                  *, count, eps):
    """Pass 2: fused finalize + normalize + affine: y = x*scale[c] + shift[c].

    The per-c-block finalize (mean/var/rsqrt/fold) is trivial VPU/EUP work
    hidden under the DMA, so we recompute it each step instead of staging it.
    """
    s = sums_ref[...]                              # (c_tile, 1) f32
    sq = sumsq_ref[...]
    mean = s * (1.0 / count)
    var = jnp.maximum(sq * (1.0 / count) - mean * mean, 0.0)
    inv_std = jax.lax.rsqrt(var + eps)
    scale = gamma_ref[...].astype(jnp.float32) * inv_std
    shift = beta_ref[...].astype(jnp.float32) - mean * scale

    x = x_ref[...].astype(jnp.float32)             # (n_tile, c_tile, l_tile)
    o_ref[...] = (x * scale[None, :, :] + shift[None, :, :]).astype(o_ref.dtype)


# ----------------------------------------------------------------------------
# Tiling / budgets
# ----------------------------------------------------------------------------
def _vmem_capacity_bytes():
    try:
        info = pltpu.get_tpu_info()
        cap = getattr(info, "vmem_capacity_bytes", None)
        if cap:
            return int(cap)
    except Exception:
        pass
    return 64 * 1024 * 1024            # conservative fallback (v7x-sized VMEM)


def _budgets():
    cap = _vmem_capacity_bytes()
    if cap >= 96 * 1024 * 1024:
        # v5e / v6e: 128 MiB physical VMEM.
        return dict(block=8 << 20, vmem_limit=64 << 20,
                    single_pass=16 << 20, single_pass_limit=96 << 20)
    # v7x: 64 MiB physical VMEM -> smaller blocks, leave Mosaic headroom.
    return dict(block=5 << 20, vmem_limit=44 << 20,
                single_pass=8 << 20, single_pass_limit=48 << 20)


def _min_sublane_multiple(dtype):
    bits = jnp.dtype(dtype).itemsize * 8
    if bits >= 32:
        return 8
    if bits == 16:
        return 16
    return 32                           # int8 / fp8 pack 4 deep along sublanes


def _pick_c_tile(C, min_mult):
    if C <= min_mult or C % min_mult != 0:
        return C                        # full-dim block (always legal)
    cands = [t for t in range(min_mult, C + 1, min_mult) if C % t == 0]
    # Prefer tiles that (a) leave >= 2 c-blocks (keeps both v7x TCs busy on the
    # stats pass) and (b) stay modest so the byte budget goes to the lane axis.
    good = [t for t in cands if C // t >= 2 and t <= 256]
    if good:
        return max(good)
    good = [t for t in cands if C // t >= 2]
    if good:
        return max(good)
    return max(cands)


def _pick_tiles(N, C, L, itemsize, budget, dtype):
    c_tile = _pick_c_tile(C, _min_sublane_multiple(dtype))
    # Lane tile: largest multiple of 128 dividing L whose single-n slab fits
    # the budget (grow along lanes first -> long contiguous DMA runs).
    l_tile = None
    for cand in (8192, 4096, 2048, 1024, 512, 256, 128):
        if L % cand == 0 and c_tile * cand * itemsize <= budget:
            l_tile = cand
            break
    if l_tile is None:
        # TODO(synk): L % 128 != 0 (e.g. 7x7 maps) gives ragged lane vregs and
        # masked stores; we still reach the byte budget by growing n_tile.
        l_tile = L
    per_n = c_tile * l_tile * itemsize
    n_tile = max(1, min(N, budget // max(per_n, 1)))
    while N % n_tile != 0:              # always divide N exactly
        n_tile -= 1
    return int(n_tile), int(c_tile), int(l_tile)


# ----------------------------------------------------------------------------
# Forward
# ----------------------------------------------------------------------------
def norm_forward(x_nchw, gamma, beta, eps=_EPS, force_tiled=False):
    """BatchNorm2d forward (training-mode batch statistics). x_nchw: (N,C,H,W)."""
    N, C, H, W = x_nchw.shape
    L = H * W
    count = N * L

    x = x_nchw.reshape(N, C, L)         # zero-copy view of contiguous NCHW
    g = gamma.reshape(C, 1)
    b = beta.reshape(C, 1)

    budgets = _budgets()
    itemsize = jnp.dtype(x.dtype).itemsize

    # ---- Single-pass path: whole tensor VMEM-resident (2x HBM traffic) ------
    x_f32_bytes = N * C * L * 4
    if (not force_tiled) and x_f32_bytes <= budgets["single_pass"]:
        out = pl.pallas_call(
            functools.partial(_fused_kernel, count=count, eps=eps),
            out_shape=jax.ShapeDtypeStruct((N, C, L), x_nchw.dtype),
            grid_spec=pltpu.PrefetchScalarGridSpec(
                num_scalar_prefetch=0,
                grid=(1,),
                in_specs=[pl.BlockSpec((N, C, L), lambda i: (0, 0, 0)),
                          pl.BlockSpec((C, 1), lambda i: (0, 0)),
                          pl.BlockSpec((C, 1), lambda i: (0, 0))],
                out_specs=pl.BlockSpec((N, C, L), lambda i: (0, 0, 0)),
            ),
            compiler_params=pltpu.CompilerParams(
                dimension_semantics=("arbitrary",),
                vmem_limit_bytes=budgets["single_pass_limit"]),
        )(x, g, b)
        return out.reshape(N, C, H, W)

    # ---- Tiled two-pass path -------------------------------------------------
    n_tile, c_tile, l_tile = _pick_tiles(N, C, L, itemsize,
                                         budgets["block"], x.dtype)
    grid = (C // c_tile, N // n_tile, L // l_tile)

    x_spec = pl.BlockSpec((n_tile, c_tile, l_tile), lambda c, n, l: (n, c, l))
    vec_spec = pl.BlockSpec((c_tile, 1), lambda c, n, l: (c, 0))

    # Pass 1: per-channel sum / sum-of-squares (1 HBM read of x).
    sums, sumsq = pl.pallas_call(
        _stats_kernel,
        out_shape=(
            jax.ShapeDtypeStruct((C, 1), jnp.float32),
            jax.ShapeDtypeStruct((C, 1), jnp.float32),
        ),
        grid_spec=pltpu.PrefetchScalarGridSpec(
            num_scalar_prefetch=0,
            grid=grid,
            in_specs=[x_spec],
            out_specs=[vec_spec, vec_spec],
        ),
        compiler_params=pltpu.CompilerParams(
            dimension_semantics=("parallel", "arbitrary", "arbitrary"),
            vmem_limit_bytes=budgets["vmem_limit"]),
    )(x)

    # Pass 2: fused finalize + normalize + affine (1 HBM read + 1 write).
    out = pl.pallas_call(
        functools.partial(_apply_kernel, count=count, eps=eps),
        out_shape=jax.ShapeDtypeStruct((N, C, L), x_nchw.dtype),
        grid_spec=pltpu.PrefetchScalarGridSpec(
            num_scalar_prefetch=0,
            grid=grid,
            in_specs=[x_spec, vec_spec, vec_spec, vec_spec, vec_spec],
            out_specs=x_spec,
        ),
        compiler_params=pltpu.CompilerParams(
            dimension_semantics=("parallel", "parallel", "parallel"),
            vmem_limit_bytes=budgets["vmem_limit"]),
    )(x, sums, sumsq, g, b)

    return out.reshape(N, C, H, W)


# ----------------------------------------------------------------------------
# Test
# ----------------------------------------------------------------------------
def _reference(x, gamma, beta, eps=_EPS):
    C = x.shape[1]
    mean = jnp.mean(x, axis=(0, 2, 3), keepdims=True)
    var = jnp.mean((x - mean) ** 2, axis=(0, 2, 3), keepdims=True)
    y = (x - mean) / jnp.sqrt(var + eps)
    return y * gamma.reshape(1, C, 1, 1) + beta.reshape(1, C, 1, 1)


if __name__ == "__main__":
    key = jax.random.PRNGKey(0)
    kx, kg, kb, kx2, kg2, kb2 = jax.random.split(key, 6)

    # --- main check (single-pass VMEM-resident path) ---
    N, C, H, W = 2, 4, 16, 16
    x = jax.random.normal(kx, (N, C, H, W), dtype=jnp.float32)
    gamma = 1.0 + 0.1 * jax.random.normal(kg, (C,), dtype=jnp.float32)
    beta = 0.1 * jax.random.normal(kb, (C,), dtype=jnp.float32)

    out = jax.block_until_ready(norm_forward(x, gamma, beta))
    ref = _reference(x, gamma, beta)
    assert out.shape == ref.shape
    assert jnp.allclose(out, ref, atol=1e-4, rtol=1e-4), "single-pass mismatch"

    # --- secondary check: exercise the tiled two-pass path at small shapes ---
    N2, C2, H2, W2 = 2, 16, 16, 16
    x2 = jax.random.normal(kx2, (N2, C2, H2, W2), dtype=jnp.float32)
    gamma2 = 1.0 + 0.1 * jax.random.normal(kg2, (C2,), dtype=jnp.float32)
    beta2 = 0.1 * jax.random.normal(kb2, (C2,), dtype=jnp.float32)

    out2 = jax.block_until_ready(
        norm_forward(x2, gamma2, beta2, force_tiled=True))
    ref2 = _reference(x2, gamma2, beta2)
    assert out2.shape == ref2.shape
    assert jnp.allclose(out2, ref2, atol=1e-4, rtol=1e-4), "tiled-path mismatch"

    print("KERNEL_OK")
</pallas_src>

<mosaic_0001>
module attributes {stable_mosaic.version = 11 : i64} {
  func.func @_fused_kernel(%arg0: i32, %arg1: memref<2x4x256xf32, #tpu.memory_space<vmem>>, %arg2: memref<4x1xf32, #tpu.memory_space<vmem>>, %arg3: memref<4x1xf32, #tpu.memory_space<vmem>>, %arg4: memref<2x4x256xf32, #tpu.memory_space<vmem>>) attributes {dimension_semantics = [#tpu.dimension_semantics<arbitrary>], iteration_bounds = array<i64: 1>, scalar_prefetch = 0 : i64, scratch_operands = 0 : i64, tpu.core_type = #tpu.core_type<tc>, window_params = [{pipeline_mode = #tpu.pipeline_mode<synchronous>, transform_indices = @transform_0, window_bounds = array<i64: 2, 4, 256>}, {pipeline_mode = #tpu.pipeline_mode<synchronous>, transform_indices = @transform_1, window_bounds = array<i64: 4, 1>}, {pipeline_mode = #tpu.pipeline_mode<synchronous>, transform_indices = @transform_2, window_bounds = array<i64: 4, 1>}, {pipeline_mode = #tpu.pipeline_mode<synchronous>, transform_indices = @transform_3, window_bounds = array<i64: 2, 4, 256>}]} {
    %c0 = arith.constant 0 : index
    %c0_0 = arith.constant 0 : index
    %c0_1 = arith.constant 0 : index
    %0 = vector.load %arg1[%c0, %c0_0, %c0_1] : memref<2x4x256xf32, #tpu.memory_space<vmem>>, vector<2x4x256xf32>
    %cst = arith.constant dense<0.000000e+00> : vector<2x4xf32>
    %1 = vector.multi_reduction <add>, %0, %cst [2] : vector<2x4x256xf32> to vector<2x4xf32>
    %2 = vector.shape_cast %1 : vector<2x4xf32> to vector<2x4x1xf32>
    %cst_2 = arith.constant dense<0.000000e+00> : vector<4x1xf32>
    %3 = vector.multi_reduction <add>, %2, %cst_2 [0] : vector<2x4x1xf32> to vector<4x1xf32>
    %4 = vector.shape_cast %3 : vector<4x1xf32> to vector<1x4x1xf32>
    %cst_3 = arith.constant 0.001953125 : f32
    %5 = vector.broadcast %cst_3 : f32 to vector<1x4x1xf32>
    %6 = arith.mulf %4, %5 : vector<1x4x1xf32>
    %7 = vector.broadcast %6 : vector<1x4x1xf32> to vector<2x4x256xf32>
    %8 = arith.subf %0, %7 : vector<2x4x256xf32>
    %9 = arith.mulf %8, %8 : vector<2x4x256xf32>
    %cst_4 = arith.constant dense<0.000000e+00> : vector<2x4xf32>
    %10 = vector.multi_reduction <add>, %9, %cst_4 [2] : vector<2x4x256xf32> to vector<2x4xf32>
    %11 = vector.shape_cast %10 : vector<2x4xf32> to vector<2x4x1xf32>
    %cst_5 = arith.constant dense<0.000000e+00> : vector<4x1xf32>
    %12 = vector.multi_reduction <add>, %11, %cst_5 [0] : vector<2x4x1xf32> to vector<4x1xf32>
    %13 = vector.shape_cast %12 : vector<4x1xf32> to vector<1x4x1xf32>
    %cst_6 = arith.constant 0.001953125 : f32
    %14 = vector.broadcast %cst_6 : f32 to vector<1x4x1xf32>
    %15 = arith.mulf %13, %14 : vector<1x4x1xf32>
    %cst_7 = arith.constant 9.99999974E-6 : f32
    %16 = vector.broadcast %cst_7 : f32 to vector<1x4x1xf32>
    %17 = arith.addf %15, %16 : vector<1x4x1xf32>
    %18 = math.rsqrt %17 : vector<1x4x1xf32>
    %c0_8 = arith.constant 0 : index
    %c0_9 = arith.constant 0 : index
    %19 = vector.load %arg2[%c0_8, %c0_9] : memref<4x1xf32, #tpu.memory_space<vmem>>, vector<4x1xf32>
    %20 = vector.shape_cast %19 : vector<4x1xf32> to vector<1x4x1xf32>
    %21 = arith.mulf %20, %18 : vector<1x4x1xf32>
    %c0_10 = arith.constant 0 : index
    %c0_11 = arith.constant 0 : index
    %22 = vector.load %arg3[%c0_10, %c0_11] : memref<4x1xf32, #tpu.memory_space<vmem>>, vector<4x1xf32>
    %23 = vector.shape_cast %22 : vector<4x1xf32> to vector<1x4x1xf32>
    %24 = vector.broadcast %21 : vector<1x4x1xf32> to vector<2x4x256xf32>
    %25 = arith.mulf %8, %24 : vector<2x4x256xf32>
    %26 = vector.broadcast %23 : vector<1x4x1xf32> to vector<2x4x256xf32>
    %27 = arith.addf %25, %26 : vector<2x4x256xf32>
    %c0_12 = arith.constant 0 : index
    %c0_13 = arith.constant 0 : index
    %c0_14 = arith.constant 0 : index
    %28 = vector.load %arg4[%c0_12, %c0_13, %c0_14] : memref<2x4x256xf32, #tpu.memory_space<vmem>>, vector<2x4x256xf32>
    tpu.vector_store %arg4[%c0_12, %c0_13, %c0_14], %27 {strides = array<i32>} : memref<2x4x256xf32, #tpu.memory_space<vmem>>, vector<2x4x256xf32>,
    return
  }
  func.func @transform_0(%arg0: i32) -> (i32, i32, i32) {
    %c0_i32 = arith.constant 0 : i32
    %c0_i32_0 = arith.constant 0 : i32
    %c0_i32_1 = arith.constant 0 : i32
    %c0_i32_2 = arith.constant 0 : i32
    return %c0_i32, %c0_i32_0, %c0_i32_1 : i32, i32, i32
  }
  func.func @transform_1(%arg0: i32) -> (i32, i32) {
    %c0_i32 = arith.constant 0 : i32
    %c0_i32_0 = arith.constant 0 : i32
    %c0_i32_1 = arith.constant 0 : i32
    return %c0_i32, %c0_i32_0 : i32, i32
  }
  func.func @transform_2(%arg0: i32) -> (i32, i32) {
    %c0_i32 = arith.constant 0 : i32
    %c0_i32_0 = arith.constant 0 : i32
    %c0_i32_1 = arith.constant 0 : i32
    return %c0_i32, %c0_i32_0 : i32, i32
  }
  func.func @transform_3(%arg0: i32) -> (i32, i32, i32) {
    %c0_i32 = arith.constant 0 : i32
    %c0_i32_0 = arith.constant 0 : i32
    %c0_i32_1 = arith.constant 0 : i32
    %c0_i32_2 = arith.constant 0 : i32
    return %c0_i32, %c0_i32_0, %c0_i32_1 : i32, i32, i32
  }
}

</mosaic_0001>

<llo_original>
// kernel: tpu_custom_call.1
$region0: #{tpu_custom_call.1}
  #allocation0 [shape = 'u32[]', space=smem, size = 0x4, offset = 0x4, fixed_abs, tag = 'smem constant byte address 0x4 - core index']
  #allocation1 [shape = 'u32[72,128]{1,0:T(1,128)}', space=vmem, size = 0x9000, scoped, tag = 'internal scratch']
  %s0 = inlined_call_operand.hbm [shape: f32[2,4,256], index: 0, kind: input, shape index: {}]
  %s1 = inlined_call_operand.vmem [shape: f32[4,1], index: 1, kind: input, shape index: {}]
  %s2 = inlined_call_operand.vmem [shape: f32[4,1], index: 2, kind: input, shape index: {}]
  %s3 = inlined_call_operand.hbm [shape: f32[2,4,256], index: 3, kind: output, shape index: {}]
  %s4 = sld [smem:[#allocation0]]
  $region26: #{tpu_custom_call.1} parent=0
    _
  %s6 = ssub.s32 1, %s4
  %s7 = scalar_select 0, %s6, %s4
  $region1: #{tpu_custom_call.1} parent=0
    #allocation2 [shape = 'u8[8192]{0}', space=vmem, size = 0x2000, scoped, tag = 'input window, operand 0, single buffered']
    #allocation3 [shape = 's32[1]{0}', space=sflag, size = 0x4, scoped, tag = 'scoped memory for tpu_custom_call.1']
    #allocation4 [shape = 's32[1]{0}', space=sflag, size = 0x4, scoped, tag = 'scoped memory for tpu_custom_call.1']
    #allocation5 [shape = 'u8[8192]{0}', space=vmem, size = 0x2000, scoped, tag = 'output window, operand 0, single buffered']
    %8 = vsyncpa [#allocation3], 0
    %9 = vsyncpa [#allocation4], 0
    // Predicated region
    $region2: #{tpu_custom_call.1} parent=1 // pred_check
      _
    $region3: #{tpu_custom_call.1} parent=1 // pred_check_branch
      %11 = sbr.rel (0) target = $region5
    $region4: #{tpu_custom_call.1} parent=1 // pred_region
      %13 = vsyncadd [#allocation3], 0
      %s14 = sshll.u32 %s0, 4
      %s15 = int_to_ptr.hbm [resolvable:$true] %s14
      %s16 = sshll.u32 [#allocation2], 4
      %s17 = int_to_ptr.vmem [resolvable:$true] %s16
      %22 = dma.hbm_to_vmem [thread:$0]  %s15, 256, %s17, [#allocation3], 128, 128, 8
    $region5: #{tpu_custom_call.1} parent=1 // pred_fallthru
      _
    // Predicated region
    $region6: #{tpu_custom_call.1} parent=1 // pred_check
      _
    $region7: #{tpu_custom_call.1} parent=1 // pred_check_branch
      %24 = sbr.rel (0) target = $region9
    $region8: #{tpu_custom_call.1} parent=1 // pred_region
      _
    $region9: #{tpu_custom_call.1} parent=1 // pred_fallthru
      _
    // Predicated region
    $region10: #{tpu_custom_call.1} parent=1 // pred_check
      _
    $region11: #{tpu_custom_call.1} parent=1 // pred_check_branch
      %26 = sbr.rel (0) target = $region13
    $region12: #{tpu_custom_call.1} parent=1 // pred_region
      _
    $region13: #{tpu_custom_call.1} parent=1 // pred_fallthru
      _
    // Predicated region
    $region14: #{tpu_custom_call.1} parent=1 // pred_check
      _
    $region15: #{tpu_custom_call.1} parent=1 // pred_check_branch
      %28 = sbr.rel (0) target = $region17
    $region16: #{tpu_custom_call.1} parent=1 // pred_region
      %30 = dma.done [#allocation3], 256
    $region17: #{tpu_custom_call.1} parent=1 // pred_fallthru
      _
    %v31 = vld [vmem:[#allocation2] sm:$0xff]
    %v32 = vld [vmem:[#allocation2 + $0x8] sm:$0xff]
    %35 = vst [vmem:[#allocation1] ss:$2 sm:$0xff] %v31
    %v36 = vld.sshfl [vmem:[#allocation1] sm:$0xff pattern:$0x75316420]
    %v37 = vld.sshfl [vmem:[#allocation1 + $0x8] sm:$0xff pattern:$0x75316420]
    %s38 = scalar_lea.vmem [#allocation1], 16
    %39 = vst [vmem:[%s38] ss:$2 sm:$0xff] %v32
    %v40 = vld.sshfl [vmem:[#allocation1 + $0x10] sm:$0xff pattern:$0x75316420]
    %v41 = vld.sshfl [vmem:[#allocation1 + $0x18] sm:$0xff pattern:$0x75316420]
    %vm46 = vcmask 1043456
    %v47 = vsel %vm46, %v36, 0.0
    %v48 = vsel %vm46, %v37, 0.0
    %v49 = vadd.f32 %v47, %v48
    %50 = vadd.xlane.f32.xlu0 %v49
    %v51 = vpop.xlane.xlu0 %50
    %v52 = vsel %vm46, %v40, 0.0
    %v53 = vsel %vm46, %v41, 0.0
    %v54 = vadd.f32 %v52, %v53
    %55 = vadd.xlane.f32.xlu0 %v54
    %v56 = vpop.xlane.xlu0 %55
    %v57 = vsel %vm46, %v51, 0.0
    %v58 = vsel %vm46, %v56, 0.0
    %v59 = vadd.f32 %v57, %v58
    %v60 = vmul.f32 %v59, 0.001953125
    %v63 = vunpack.c.l.s4 839922192
    %v64 = vunpack.c.0.s8 %v63
    %v65 = vperm.slane %v60, %v64
    %v67 = vsub.f32 %v31, %v65
    %v68 = vsub.f32 %v32, %v65
    %v69 = vmul.f32 %v67, %v67
    %v70 = vmul.f32 %v68, %v68
    %73 = vst [vmem:[#allocation1] ss:$2 sm:$0xff] %v69
    %v74 = vld.sshfl [vmem:[#allocation1] sm:$0xff pattern:$0x75316420]
    %v75 = vld.sshfl [vmem:[#allocation1 + $0x8] sm:$0xff pattern:$0x75316420]
    %s76 = scalar_lea.vmem [#allocation1], 16
    %77 = vst [vmem:[%s76] ss:$2 sm:$0xff] %v70
    %v78 = vld.sshfl [vmem:[#allocation1 + $0x10] sm:$0xff pattern:$0x75316420]
    %v79 = vld.sshfl [vmem:[#allocation1 + $0x18] sm:$0xff pattern:$0x75316420]
    %v84 = vsel %vm46, %v74, 0.0
    %v85 = vsel %vm46, %v75, 0.0
    %v86 = vadd.f32 %v84, %v85
    %87 = vadd.xlane.f32.xlu0 %v86
    %v88 = vpop.xlane.xlu0 %87
    %v89 = vsel %vm46, %v78, 0.0
    %v90 = vsel %vm46, %v79, 0.0
    %v91 = vadd.f32 %v89, %v90
    %92 = vadd.xlane.f32.xlu0 %v91
    %v93 = vpop.xlane.xlu0 %92
    %v94 = vsel %vm46, %v88, 0.0
    %v95 = vsel %vm46, %v93, 0.0
    %v96 = vadd.f32 %v94, %v95
    %v97 = vmul.f32 %v96, 0.001953125
    %v98 = vadd.f32 %v97, 1e-05
    %v99 = vrsqrt.pop %v98
    %v100 = vmul.f32 %v99, %v98
    %v101 = vmul.f32 %v100, %v99
    %v102 = vmul.f32 0.5, %v101
    %v103 = vsub.f32 1.5, %v102
    %v104 = vmul.f32 %v99, %v103
    %vm105 = vweird.f32 %v98
    %vm106 = vweird.f32 %v99
    %vm107 = vmor %vm105, %vm106
    %v108 = vsel %vm107, %v99, %v104
    %v109 = vld [vmem:[%s1] sm:$0xf]
    %v110 = vmul.f32 %v109, %v108
    %v111 = vld [vmem:[%s2] sm:$0xf]
    %113 = vset.pattern.permute.xlu0 0
    %114 = vperm.xlu0 %113, %v110
    %v115 = vpop.permute.xlu0 %114
    %v117 = vunpack.c.l.s4 839922192
    %v118 = vunpack.c.0.s8 %v117
    %v119 = vperm.slane %v115, %v118
    %v121 = vmul.f32 %v67, %v119
    %v122 = vmul.f32 %v68, %v119
    %124 = vset.pattern.permute.xlu0 0
    %125 = vperm.xlu0 %124, %v111
    %v126 = vpop.permute.xlu0 %125
    %v128 = vunpack.c.l.s4 839922192
    %v129 = vunpack.c.0.s8 %v128
    %v130 = vperm.slane %v126, %v129
    %v132 = vadd.f32 %v121, %v130
    %v133 = vadd.f32 %v122, %v130
    %134 = vst [vmem:[#allocation5] sm:$0xff] %v132
    %135 = vst [vmem:[#allocation5 + $0x8] sm:$0xff] %v133
    // Predicated region
    $region18: #{tpu_custom_call.1} parent=1 // pred_check
      _
    $region19: #{tpu_custom_call.1} parent=1 // pred_check_branch
      %137 = sbr.rel (0) target = $region21
    $region20: #{tpu_custom_call.1} parent=1 // pred_region
      %139 = vsyncadd [#allocation4], 0
      %s140 = sshll.u32 [#allocation5], 4
      %s141 = int_to_ptr.vmem [resolvable:$true] %s140
      %s142 = sshll.u32 %s3, 4
      %s143 = int_to_ptr.hbm [resolvable:$true] %s142
      %148 = dma.vmem_to_hbm [thread:$0]  %s141, 256, %s143, [#allocation4], 128, 128, 8
    $region21: #{tpu_custom_call.1} parent=1 // pred_fallthru
      _
    // Predicated region
    $region22: #{tpu_custom_call.1} parent=1 // pred_check
      _
    $region23: #{tpu_custom_call.1} parent=1 // pred_check_branch
      %150 = sbr.rel (0) target = $region25
    $region24: #{tpu_custom_call.1} parent=1 // pred_region
      %152 = dma.done [#allocation4], 256
    $region25: #{tpu_custom_call.1} parent=1 // pred_fallthru
      _
    %153 = vsyncpa [#allocation3], 1
    %154 = vsyncpa [#allocation4], 1

</llo_original>
